<compile_context>
chip_gen: v7x
topology: tpu7x:2x2x1
jax: 0.10.0
libtpu: 0.0.40
codegen_flags: <defaults>
</compile_context>

<pallas_src>
import functools

import jax
import jax.numpy as jnp
from jax import lax
from jax.experimental import pallas as pl
from jax.experimental.pallas import tpu as pltpu


def _sparse_conv_kernel(x_ref, m_ref, wmask_ref, wt_ref, b_ref,
                        y_ref, mask_out_ref,
                        f_ref, fm_ref, col_ref,
                        *, H, W, K, Cin, Cout):
    # x_ref:     (1, Cin, H*W)       f32   one batch element, flat spatial
    # m_ref:     (1, 1,  H*W)        f32   validity mask, flat spatial
    # wmask_ref: (K, H*W)            f32   per-dx W-boundary masks (static)
    # wt_ref:    (Cout+1, K*K*Cpad)  bf16  fused conv+count weight (transposed)
    # b_ref:     (Cout, 1)           f32   bias
    # y_ref:        (1, Cout, H*W)
    # mask_out_ref: (1, 1,   H*W)
    # f_ref:     (Cpad, Hp*W + 2p)   bf16  scratch: [x*m ; m ; zero channels], H-halo'd
    # fm_ref:    (1,    Hp*W + 2p)   f32   scratch: mask with H-halo (max-pool path)
    # col_ref:   (K*K*Cpad, H*W)     bf16  scratch: im2col buffer
    p = K // 2
    HW = H * W
    Cpad = f_ref.shape[0]
    base = p * (W + 1)  # flat offset of pixel (0, 0) inside the halo buffer

    # Re-zero the halo buffers every grid step (cheap; scratch contents must
    # not be assumed to persist across steps / cores).
    f_ref[...] = jnp.zeros_like(f_ref)
    fm_ref[...] = jnp.zeros_like(fm_ref)

    m = m_ref[0]                             # (1, HW)  f32
    xm = x_ref[0] * m                        # (Cin, HW) f32 (elementwise kept f32)

    f_ref[:Cin, base:base + HW] = xm.astype(jnp.bfloat16)
    f_ref[Cin:Cin + 1, base:base + HW] = m.astype(jnp.bfloat16)
    fm_ref[:, base:base + HW] = m

    # im2col: one lane-shifted slice per tap; lanes whose source column would
    # wrap into the neighbouring image row are zeroed with a precomputed mask.
    mp = None
    for dy in range(K):
        for dx in range(K):
            t = dy * K + dx
            off = dy * W + dx
            tap = f_ref[:, off:off + HW]                 # (Cpad, HW) bf16
            mtap = fm_ref[:, off:off + HW]               # (1,   HW) f32
            if dx != p:                                  # centre column needs no mask
                wm = wmask_ref[dx:dx + 1, :]             # (1, HW) f32
                tap = tap * wm.astype(jnp.bfloat16)
                mtap = mtap * wm
            col_ref[t * Cpad:(t + 1) * Cpad, :] = tap
            mp = mtap if mp is None else jnp.maximum(mp, mtap)

    # One fused MXU matmul: rows [0, Cout) = conv(mask * x), row Cout = count.
    res = jnp.dot(wt_ref[...], col_ref[...],
                  preferred_element_type=jnp.float32)    # (Cout+1, HW) f32
    conv = res[:Cout, :]
    count = res[Cout:Cout + 1, :]

    c = count + 1e-8
    inv = pl.reciprocal(c, approx=True)                  # EUP seed
    inv = inv * (2.0 - c * inv)                          # one Newton step
    y = conv * inv + b_ref[...]
    y_ref[0] = jnp.maximum(y, 0.0).astype(y_ref.dtype)

    # Max-pool of the validity mask.
    # NOTE: matches PyTorch's -inf-padded max_pool2d only for non-negative
    # masks (the usual {0,1} validity mask): every window contains its centre,
    # which is an in-bounds value >= 0, so zero padding cannot win.
    mask_out_ref[0] = mp.astype(mask_out_ref.dtype)


def sparse_conv(x, validity_mask, weight, bias, kernel_size):
    """x: (N, Cin, H, W), validity_mask: (N, 1, H, W), weight: (Cout, Cin, K, K),
    bias: (1, Cout, 1, 1).  Returns (y: (N, Cout, H, W), new_mask: (N, 1, H, W))."""
    N, Cin, H, W = x.shape
    Cout = weight.shape[0]
    K = kernel_size
    p = K // 2
    HW = H * W
    Hp = H + 2 * p
    L = Hp * W + 2 * p                       # flat halo-buffer length
    Cpad = ((Cin + 1 + 7) // 8) * 8          # data + mask channel, padded to sublane x8
    KKC = K * K * Cpad
    Ctot = Cout + 1

    # ---- input / parameter repacking (views + tiny tensors only; no padded
    #      copy of x is written to HBM) ----
    x_flat = x.reshape(N, Cin, HW)
    m_flat = validity_mask.reshape(N, 1, HW)

    # Fused transposed weight: rows [0, Cout) are the conv weights, row Cout is
    # an all-ones kernel on the mask channel (the valid-entry count).
    w_t = jnp.transpose(weight, (2, 3, 1, 0))                  # (K, K, Cin, Cout)
    wt_full = jnp.zeros((K, K, Cpad, Ctot), jnp.float32)
    wt_full = wt_full.at[:, :, :Cin, :Cout].set(w_t)
    wt_full = wt_full.at[:, :, Cin, Cout].set(1.0)
    wt = wt_full.reshape(KKC, Ctot).T.astype(jnp.bfloat16)     # (Ctot, KKC)

    b2 = bias.reshape(Cout, 1).astype(jnp.float32)

    # Per-dx lane masks zeroing output columns whose source pixel lies outside
    # the image width (the flat-halo trick pads H but not W).
    wcol = jnp.arange(HW, dtype=jnp.int32) % W
    dxs = jnp.arange(K, dtype=jnp.int32)[:, None]
    wmask = ((wcol[None, :] >= (p - dxs)) &
             (wcol[None, :] < (W + p - dxs))).astype(jnp.float32)   # (K, HW)

    kernel = functools.partial(_sparse_conv_kernel,
                               H=H, W=W, K=K, Cin=Cin, Cout=Cout)

    # TODO(synk): for production-sized images (v7x: 64 MiB VMEM, 2 TCs) add an
    # H-tile grid axis with a (K-1)-row halo (manual DMA or Element-indexed
    # blocks) marked "parallel" so both cores get work even at N == 1.
    out_y, out_m = pl.pallas_call(
        kernel,
        out_shape=(jax.ShapeDtypeStruct((N, Cout, HW), x.dtype),
                   jax.ShapeDtypeStruct((N, 1, HW), validity_mask.dtype)),
        grid=(N,),
        in_specs=[
            pl.BlockSpec((1, Cin, HW), lambda n: (n, 0, 0)),
            pl.BlockSpec((1, 1, HW), lambda n: (n, 0, 0)),
            pl.BlockSpec((K, HW), lambda n: (0, 0)),
            pl.BlockSpec((Ctot, KKC), lambda n: (0, 0)),
            pl.BlockSpec((Cout, 1), lambda n: (0, 0)),
        ],
        out_specs=(
            pl.BlockSpec((1, Cout, HW), lambda n: (n, 0, 0)),
            pl.BlockSpec((1, 1, HW), lambda n: (n, 0, 0)),
        ),
        scratch_shapes=[
            pltpu.VMEM((Cpad, L), jnp.bfloat16),   # halo'd [x*m ; m] (flat)
            pltpu.VMEM((1, L), jnp.float32),       # halo'd mask (flat, f32)
            pltpu.VMEM((KKC, HW), jnp.bfloat16),   # im2col buffer
        ],
        compiler_params=pltpu.CompilerParams(
            dimension_semantics=("parallel",)),
    )(x_flat, m_flat, wmask, wt, b2)

    return out_y.reshape(N, Cout, H, W), out_m.reshape(N, 1, H, W)


def _reference(x, mask, weight, bias, K):
    """Pure-JAX f32 reference of the PyTorch forward (NCHW)."""
    p = K // 2
    xm = mask * x
    conv = lax.conv_general_dilated(
        xm, weight, (1, 1), ((p, p), (p, p)),
        dimension_numbers=('NCHW', 'OIHW', 'NCHW'))
    ones_w = jnp.ones((1, 1, K, K), x.dtype)
    count = lax.conv_general_dilated(
        mask, ones_w, (1, 1), ((p, p), (p, p)),
        dimension_numbers=('NCHW', 'OIHW', 'NCHW'))
    y = jax.nn.relu(conv * (1.0 / (count + 1e-8)) + bias)
    mp = lax.reduce_window(mask, -jnp.inf, lax.max,
                           (1, 1, K, K), (1, 1, 1, 1),
                           ((0, 0), (0, 0), (p, p), (p, p)))
    return y, mp


if __name__ == "__main__":
    key = jax.random.PRNGKey(0)
    k1, k2, k3, k4 = jax.random.split(key, 4)

    N, Cin, Cout, H, W, K = 2, 4, 8, 16, 16, 3

    x = jax.random.normal(k1, (N, Cin, H, W), jnp.float32)
    validity_mask = jax.random.bernoulli(k2, 0.6, (N, 1, H, W)).astype(jnp.float32)
    # Deterministic synthetic parameters (same shapes as the nn.Module).
    weight = 0.1 * jax.random.normal(k3, (Cout, Cin, K, K), jnp.float32)
    bias = jax.random.uniform(k4, (1, Cout, 1, 1), jnp.float32)

    out_x, out_mask = sparse_conv(x, validity_mask, weight, bias, K)
    jax.block_until_ready((out_x, out_mask))

    ref_x, ref_mask = _reference(x, validity_mask, weight, bias, K)
    assert out_x.shape == (N, Cout, H, W) and out_mask.shape == (N, 1, H, W)
    # bf16 MXU inputs -> bf16-level tolerance vs the f32 reference.
    assert jnp.allclose(out_x, ref_x, rtol=1e-2, atol=1e-2)
    assert jnp.allclose(out_mask, ref_mask)

    print("KERNEL_OK")
</pallas_src>

<mosaic_0001>
module attributes {stable_mosaic.version = 11 : i64} {
  func.func @_sparse_conv_kernel(%arg0: i32, %arg1: memref<1x4x256xf32, #tpu.memory_space<vmem>>, %arg2: memref<1x1x256xf32, #tpu.memory_space<vmem>>, %arg3: memref<3x256xf32, #tpu.memory_space<vmem>>, %arg4: memref<9x72xbf16, #tpu.memory_space<vmem>>, %arg5: memref<8x1xf32, #tpu.memory_space<vmem>>, %arg6: memref<1x8x256xf32, #tpu.memory_space<vmem>>, %arg7: memref<1x1x256xf32, #tpu.memory_space<vmem>>, %arg8: memref<8x290xbf16, #tpu.memory_space<vmem>>, %arg9: memref<1x290xf32, #tpu.memory_space<vmem>>, %arg10: memref<72x256xbf16, #tpu.memory_space<vmem>>) attributes {dimension_semantics = [#tpu.dimension_semantics<parallel>], iteration_bounds = array<i64: 2>, scalar_prefetch = 0 : i64, scratch_operands = 3 : i64, tpu.core_type = #tpu.core_type<tc>, window_params = [{transform_indices = @transform_0, window_bounds = array<i64: 1, 4, 256>}, {transform_indices = @transform_1, window_bounds = array<i64: 1, 1, 256>}, {pipeline_mode = #tpu.pipeline_mode<synchronous>, transform_indices = @transform_2, window_bounds = array<i64: 3, 256>}, {pipeline_mode = #tpu.pipeline_mode<synchronous>, transform_indices = @transform_3, window_bounds = array<i64: 9, 72>}, {pipeline_mode = #tpu.pipeline_mode<synchronous>, transform_indices = @transform_4, window_bounds = array<i64: 8, 1>}, {transform_indices = @transform_5, window_bounds = array<i64: 1, 8, 256>}, {transform_indices = @transform_6, window_bounds = array<i64: 1, 1, 256>}]} {
    %cst = arith.constant 0.000000e+00 : bf16
    %0 = vector.broadcast %cst : bf16 to vector<8x290xbf16>
    %c0 = arith.constant 0 : index
    %c0_0 = arith.constant 0 : index
    %1 = vector.load %arg8[%c0, %c0_0] : memref<8x290xbf16, #tpu.memory_space<vmem>>, vector<8x290xbf16>
    tpu.vector_store %arg8[%c0, %c0_0], %0 {strides = array<i32>} : memref<8x290xbf16, #tpu.memory_space<vmem>>, vector<8x290xbf16>,
    %cst_1 = arith.constant 0.000000e+00 : f32
    %2 = vector.broadcast %cst_1 : f32 to vector<1x290xf32>
    %c0_2 = arith.constant 0 : index
    %c0_3 = arith.constant 0 : index
    %3 = vector.load %arg9[%c0_2, %c0_3] : memref<1x290xf32, #tpu.memory_space<vmem>>, vector<1x290xf32>
    tpu.vector_store %arg9[%c0_2, %c0_3], %2 {strides = array<i32>} : memref<1x290xf32, #tpu.memory_space<vmem>>, vector<1x290xf32>,
    %c0_4 = arith.constant 0 : index
    %c0_5 = arith.constant 0 : index
    %c0_6 = arith.constant 0 : index
    %4 = vector.load %arg2[%c0_4, %c0_5, %c0_6] : memref<1x1x256xf32, #tpu.memory_space<vmem>>, vector<1x1x256xf32>
    %5 = vector.shape_cast %4 : vector<1x1x256xf32> to vector<1x256xf32>
    %c0_7 = arith.constant 0 : index
    %c0_8 = arith.constant 0 : index
    %c0_9 = arith.constant 0 : index
    %6 = vector.load %arg1[%c0_7, %c0_8, %c0_9] : memref<1x4x256xf32, #tpu.memory_space<vmem>>, vector<1x4x256xf32>
    %7 = vector.shape_cast %6 : vector<1x4x256xf32> to vector<4x256xf32>
    %8 = vector.broadcast %5 : vector<1x256xf32> to vector<4x256xf32>
    %9 = arith.mulf %7, %8 : vector<4x256xf32>
    %10 = arith.truncf %9 : vector<4x256xf32> to vector<4x256xbf16>
    %c0_10 = arith.constant 0 : index
    %c17 = arith.constant 17 : index
    %11 = vector.load %arg8[%c0_10, %c17] : memref<8x290xbf16, #tpu.memory_space<vmem>>, vector<4x256xbf16>
    tpu.vector_store %arg8[%c0_10, %c17], %10 {strides = array<i32>} : memref<8x290xbf16, #tpu.memory_space<vmem>>, vector<4x256xbf16>,
    %12 = arith.truncf %5 : vector<1x256xf32> to vector<1x256xbf16>
    %c4 = arith.constant 4 : index
    %c17_11 = arith.constant 17 : index
    %13 = vector.load %arg8[%c4, %c17_11] : memref<8x290xbf16, #tpu.memory_space<vmem>>, vector<1x256xbf16>
    tpu.vector_store %arg8[%c4, %c17_11], %12 {strides = array<i32>} : memref<8x290xbf16, #tpu.memory_space<vmem>>, vector<1x256xbf16>,
    %c0_12 = arith.constant 0 : index
    %c17_13 = arith.constant 17 : index
    %14 = vector.load %arg9[%c0_12, %c17_13] : memref<1x290xf32, #tpu.memory_space<vmem>>, vector<1x256xf32>
    tpu.vector_store %arg9[%c0_12, %c17_13], %5 {strides = array<i32>} : memref<1x290xf32, #tpu.memory_space<vmem>>, vector<1x256xf32>,
    %c0_14 = arith.constant 0 : index
    %c0_15 = arith.constant 0 : index
    %15 = vector.load %arg8[%c0_14, %c0_15] : memref<8x290xbf16, #tpu.memory_space<vmem>>, vector<8x256xbf16>
    %c0_16 = arith.constant 0 : index
    %c0_17 = arith.constant 0 : index
    %16 = vector.load %arg9[%c0_16, %c0_17] : memref<1x290xf32, #tpu.memory_space<vmem>>, vector<1x256xf32>
    %c0_18 = arith.constant 0 : index
    %c0_19 = arith.constant 0 : index
    %17 = vector.load %arg3[%c0_18, %c0_19] : memref<3x256xf32, #tpu.memory_space<vmem>>, vector<1x256xf32>
    %18 = arith.truncf %17 : vector<1x256xf32> to vector<1x256xbf16>
    %19 = vector.broadcast %18 : vector<1x256xbf16> to vector<8x256xbf16>
    %20 = arith.mulf %15, %19 : vector<8x256xbf16>
    %21 = arith.mulf %16, %17 : vector<1x256xf32>
    %c0_20 = arith.constant 0 : index
    %c0_21 = arith.constant 0 : index
    %22 = vector.load %arg10[%c0_20, %c0_21] : memref<72x256xbf16, #tpu.memory_space<vmem>>, vector<8x256xbf16>
    tpu.vector_store %arg10[%c0_20, %c0_21], %20 {strides = array<i32>} : memref<72x256xbf16, #tpu.memory_space<vmem>>, vector<8x256xbf16>,
    %c0_22 = arith.constant 0 : index
    %c1 = arith.constant 1 : index
    %23 = vector.load %arg8[%c0_22, %c1] : memref<8x290xbf16, #tpu.memory_space<vmem>>, vector<8x256xbf16>
    %c0_23 = arith.constant 0 : index
    %c1_24 = arith.constant 1 : index
    %24 = vector.load %arg9[%c0_23, %c1_24] : memref<1x290xf32, #tpu.memory_space<vmem>>, vector<1x256xf32>
    %c8 = arith.constant 8 : index
    %c0_25 = arith.constant 0 : index
    %25 = vector.load %arg10[%c8, %c0_25] : memref<72x256xbf16, #tpu.memory_space<vmem>>, vector<8x256xbf16>
    tpu.vector_store %arg10[%c8, %c0_25], %23 {strides = array<i32>} : memref<72x256xbf16, #tpu.memory_space<vmem>>, vector<8x256xbf16>,
    %26 = arith.maximumf %21, %24 : vector<1x256xf32>
    %c0_26 = arith.constant 0 : index
    %c2 = arith.constant 2 : index
    %27 = vector.load %arg8[%c0_26, %c2] : memref<8x290xbf16, #tpu.memory_space<vmem>>, vector<8x256xbf16>
    %c0_27 = arith.constant 0 : index
    %c2_28 = arith.constant 2 : index
    %28 = vector.load %arg9[%c0_27, %c2_28] : memref<1x290xf32, #tpu.memory_space<vmem>>, vector<1x256xf32>
    %c2_29 = arith.constant 2 : index
    %c0_30 = arith.constant 0 : index
    %29 = vector.load %arg3[%c2_29, %c0_30] : memref<3x256xf32, #tpu.memory_space<vmem>>, vector<1x256xf32>
    %30 = arith.truncf %29 : vector<1x256xf32> to vector<1x256xbf16>
    %31 = vector.broadcast %30 : vector<1x256xbf16> to vector<8x256xbf16>
    %32 = arith.mulf %27, %31 : vector<8x256xbf16>
    %33 = arith.mulf %28, %29 : vector<1x256xf32>
    %c16 = arith.constant 16 : index
    %c0_31 = arith.constant 0 : index
    %34 = vector.load %arg10[%c16, %c0_31] : memref<72x256xbf16, #tpu.memory_space<vmem>>, vector<8x256xbf16>
    tpu.vector_store %arg10[%c16, %c0_31], %32 {strides = array<i32>} : memref<72x256xbf16, #tpu.memory_space<vmem>>, vector<8x256xbf16>,
    %35 = arith.maximumf %26, %33 : vector<1x256xf32>
    %c0_32 = arith.constant 0 : index
    %c16_33 = arith.constant 16 : index
    %36 = vector.load %arg8[%c0_32, %c16_33] : memref<8x290xbf16, #tpu.memory_space<vmem>>, vector<8x256xbf16>
    %c0_34 = arith.constant 0 : index
    %c16_35 = arith.constant 16 : index
    %37 = vector.load %arg9[%c0_34, %c16_35] : memref<1x290xf32, #tpu.memory_space<vmem>>, vector<1x256xf32>
    %c0_36 = arith.constant 0 : index
    %c0_37 = arith.constant 0 : index
    %38 = vector.load %arg3[%c0_36, %c0_37] : memref<3x256xf32, #tpu.memory_space<vmem>>, vector<1x256xf32>
    %39 = arith.truncf %38 : vector<1x256xf32> to vector<1x256xbf16>
    %40 = vector.broadcast %39 : vector<1x256xbf16> to vector<8x256xbf16>
    %41 = arith.mulf %36, %40 : vector<8x256xbf16>
    %42 = arith.mulf %37, %38 : vector<1x256xf32>
    %c24 = arith.constant 24 : index
    %c0_38 = arith.constant 0 : index
    %43 = vector.load %arg10[%c24, %c0_38] : memref<72x256xbf16, #tpu.memory_space<vmem>>, vector<8x256xbf16>
    tpu.vector_store %arg10[%c24, %c0_38], %41 {strides = array<i32>} : memref<72x256xbf16, #tpu.memory_space<vmem>>, vector<8x256xbf16>,
    %44 = arith.maximumf %35, %42 : vector<1x256xf32>
    %c0_39 = arith.constant 0 : index
    %c17_40 = arith.constant 17 : index
    %45 = vector.load %arg8[%c0_39, %c17_40] : memref<8x290xbf16, #tpu.memory_space<vmem>>, vector<8x256xbf16>
    %c0_41 = arith.constant 0 : index
    %c17_42 = arith.constant 17 : index
    %46 = vector.load %arg9[%c0_41, %c17_42] : memref<1x290xf32, #tpu.memory_space<vmem>>, vector<1x256xf32>
    %c32 = arith.constant 32 : index
    %c0_43 = arith.constant 0 : index
    %47 = vector.load %arg10[%c32, %c0_43] : memref<72x256xbf16, #tpu.memory_space<vmem>>, vector<8x256xbf16>
    tpu.vector_store %arg10[%c32, %c0_43], %45 {strides = array<i32>} : memref<72x256xbf16, #tpu.memory_space<vmem>>, vector<8x256xbf16>,
    %48 = arith.maximumf %44, %46 : vector<1x256xf32>
    %c0_44 = arith.constant 0 : index
    %c18 = arith.constant 18 : index
    %49 = vector.load %arg8[%c0_44, %c18] : memref<8x290xbf16, #tpu.memory_space<vmem>>, vector<8x256xbf16>
    %c0_45 = arith.constant 0 : index
    %c18_46 = arith.constant 18 : index
    %50 = vector.load %arg9[%c0_45, %c18_46] : memref<1x290xf32, #tpu.memory_space<vmem>>, vector<1x256xf32>
    %c2_47 = arith.constant 2 : index
    %c0_48 = arith.constant 0 : index
    %51 = vector.load %arg3[%c2_47, %c0_48] : memref<3x256xf32, #tpu.memory_space<vmem>>, vector<1x256xf32>
    %52 = arith.truncf %51 : vector<1x256xf32> to vector<1x256xbf16>
    %53 = vector.broadcast %52 : vector<1x256xbf16> to vector<8x256xbf16>
    %54 = arith.mulf %49, %53 : vector<8x256xbf16>
    %55 = arith.mulf %50, %51 : vector<1x256xf32>
    %c40 = arith.constant 40 : index
    %c0_49 = arith.constant 0 : index
    %56 = vector.load %arg10[%c40, %c0_49] : memref<72x256xbf16, #tpu.memory_space<vmem>>, vector<8x256xbf16>
    tpu.vector_store %arg10[%c40, %c0_49], %54 {strides = array<i32>} : memref<72x256xbf16, #tpu.memory_space<vmem>>, vector<8x256xbf16>,
    %57 = arith.maximumf %48, %55 : vector<1x256xf32>
    %c0_50 = arith.constant 0 : index
    %c32_51 = arith.constant 32 : index
    %58 = vector.load %arg8[%c0_50, %c32_51] : memref<8x290xbf16, #tpu.memory_space<vmem>>, vector<8x256xbf16>
    %c0_52 = arith.constant 0 : index
    %c32_53 = arith.constant 32 : index
    %59 = vector.load %arg9[%c0_52, %c32_53] : memref<1x290xf32, #tpu.memory_space<vmem>>, vector<1x256xf32>
    %c0_54 = arith.constant 0 : index
    %c0_55 = arith.constant 0 : index
    %60 = vector.load %arg3[%c0_54, %c0_55] : memref<3x256xf32, #tpu.memory_space<vmem>>, vector<1x256xf32>
    %61 = arith.truncf %60 : vector<1x256xf32> to vector<1x256xbf16>
    %62 = vector.broadcast %61 : vector<1x256xbf16> to vector<8x256xbf16>
    %63 = arith.mulf %58, %62 : vector<8x256xbf16>
    %64 = arith.mulf %59, %60 : vector<1x256xf32>
    %c48 = arith.constant 48 : index
    %c0_56 = arith.constant 0 : index
    %65 = vector.load %arg10[%c48, %c0_56] : memref<72x256xbf16, #tpu.memory_space<vmem>>, vector<8x256xbf16>
    tpu.vector_store %arg10[%c48, %c0_56], %63 {strides = array<i32>} : memref<72x256xbf16, #tpu.memory_space<vmem>>, vector<8x256xbf16>,
    %66 = arith.maximumf %57, %64 : vector<1x256xf32>
    %c0_57 = arith.constant 0 : index
    %c33 = arith.constant 33 : index
    %67 = vector.load %arg8[%c0_57, %c33] : memref<8x290xbf16, #tpu.memory_space<vmem>>, vector<8x256xbf16>
    %c0_58 = arith.constant 0 : index
    %c33_59 = arith.constant 33 : index
    %68 = vector.load %arg9[%c0_58, %c33_59] : memref<1x290xf32, #tpu.memory_space<vmem>>, vector<1x256xf32>
    %c56 = arith.constant 56 : index
    %c0_60 = arith.constant 0 : index
    %69 = vector.load %arg10[%c56, %c0_60] : memref<72x256xbf16, #tpu.memory_space<vmem>>, vector<8x256xbf16>
    tpu.vector_store %arg10[%c56, %c0_60], %67 {strides = array<i32>} : memref<72x256xbf16, #tpu.memory_space<vmem>>, vector<8x256xbf16>,
    %70 = arith.maximumf %66, %68 : vector<1x256xf32>
    %c0_61 = arith.constant 0 : index
    %c34 = arith.constant 34 : index
    %71 = vector.load %arg8[%c0_61, %c34] : memref<8x290xbf16, #tpu.memory_space<vmem>>, vector<8x256xbf16>
    %c0_62 = arith.constant 0 : index
    %c34_63 = arith.constant 34 : index
    %72 = vector.load %arg9[%c0_62, %c34_63] : memref<1x290xf32, #tpu.memory_space<vmem>>, vector<1x256xf32>
    %c2_64 = arith.constant 2 : index
    %c0_65 = arith.constant 0 : index
    %73 = vector.load %arg3[%c2_64, %c0_65] : memref<3x256xf32, #tpu.memory_space<vmem>>, vector<1x256xf32>
    %74 = arith.truncf %73 : vector<1x256xf32> to vector<1x256xbf16>
    %75 = vector.broadcast %74 : vector<1x256xbf16> to vector<8x256xbf16>
    %76 = arith.mulf %71, %75 : vector<8x256xbf16>
    %77 = arith.mulf %72, %73 : vector<1x256xf32>
    %c64 = arith.constant 64 : index
    %c0_66 = arith.constant 0 : index
    %78 = vector.load %arg10[%c64, %c0_66] : memref<72x256xbf16, #tpu.memory_space<vmem>>, vector<8x256xbf16>
    tpu.vector_store %arg10[%c64, %c0_66], %76 {strides = array<i32>} : memref<72x256xbf16, #tpu.memory_space<vmem>>, vector<8x256xbf16>,
    %79 = arith.maximumf %70, %77 : vector<1x256xf32>
    %c0_67 = arith.constant 0 : index
    %c0_68 = arith.constant 0 : index
    %80 = vector.load %arg4[%c0_67, %c0_68] : memref<9x72xbf16, #tpu.memory_space<vmem>>, vector<9x72xbf16>
    %c0_69 = arith.constant 0 : index
    %c0_70 = arith.constant 0 : index
    %81 = vector.load %arg10[%c0_69, %c0_70] : memref<72x256xbf16, #tpu.memory_space<vmem>>, vector<72x256xbf16>
    %cst_71 = arith.constant dense<0.000000e+00> : vector<9x256xf32>
    %82 = tpu.matmul %80, %81, %cst_71 {dimension_numbers = #tpu.dot_dimension_numbers<[1], [0], [0], [1], [0, 0, 1, 1], [], []>} : vector<9x72xbf16>, vector<72x256xbf16>, vector<9x256xf32> -> vector<9x256xf32>
    %83 = vector.extract_strided_slice %82 {offsets = [0, 0], sizes = [8, 256], strides = [1, 1]} : vector<9x256xf32> to vector<8x256xf32>
    %84 = vector.extract_strided_slice %82 {offsets = [8, 0], sizes = [1, 256], strides = [1, 1]} : vector<9x256xf32> to vector<1x256xf32>
    %cst_72 = arith.constant 9.99999993E-9 : f32
    %85 = vector.broadcast %cst_72 : f32 to vector<1x256xf32>
    %86 = arith.addf %84, %85 : vector<1x256xf32>
    %87 = tpu.reciprocal %86 {approx = true} : vector<1x256xf32> -> vector<1x256xf32>
    %88 = arith.mulf %86, %87 : vector<1x256xf32>
    %cst_73 = arith.constant 2.000000e+00 : f32
    %89 = vector.broadcast %cst_73 : f32 to vector<1x256xf32>
    %90 = arith.subf %89, %88 : vector<1x256xf32>
    %91 = arith.mulf %87, %90 : vector<1x256xf32>
    %92 = vector.broadcast %91 : vector<1x256xf32> to vector<8x256xf32>
    %93 = arith.mulf %83, %92 : vector<8x256xf32>
    %c0_74 = arith.constant 0 : index
    %c0_75 = arith.constant 0 : index
    %94 = vector.load %arg5[%c0_74, %c0_75] : memref<8x1xf32, #tpu.memory_space<vmem>>, vector<8x1xf32>
    %95 = vector.broadcast %94 : vector<8x1xf32> to vector<8x256xf32>
    %96 = arith.addf %93, %95 : vector<8x256xf32>
    %cst_76 = arith.constant 0.000000e+00 : f32
    %97 = vector.broadcast %cst_76 : f32 to vector<8x256xf32>
    %98 = arith.maximumf %96, %97 : vector<8x256xf32>
    %c0_77 = arith.constant 0 : index
    %c0_78 = arith.constant 0 : index
    %c0_79 = arith.constant 0 : index
    %99 = vector.load %arg6[%c0_77, %c0_78, %c0_79] : memref<1x8x256xf32, #tpu.memory_space<vmem>>, vector<1x8x256xf32>
    %100 = vector.shape_cast %99 : vector<1x8x256xf32> to vector<8x256xf32>
    %101 = vector.shape_cast %98 : vector<8x256xf32> to vector<1x8x256xf32>
    tpu.vector_store %arg6[%c0_77, %c0_78, %c0_79], %101 {strides = array<i32>} : memref<1x8x256xf32, #tpu.memory_space<vmem>>, vector<1x8x256xf32>,
    %c0_80 = arith.constant 0 : index
    %c0_81 = arith.constant 0 : index
    %c0_82 = arith.constant 0 : index
    %102 = vector.load %arg7[%c0_80, %c0_81, %c0_82] : memref<1x1x256xf32, #tpu.memory_space<vmem>>, vector<1x1x256xf32>
    %103 = vector.shape_cast %102 : vector<1x1x256xf32> to vector<1x256xf32>
    %104 = vector.shape_cast %79 : vector<1x256xf32> to vector<1x1x256xf32>
    tpu.vector_store %arg7[%c0_80, %c0_81, %c0_82], %104 {strides = array<i32>} : memref<1x1x256xf32, #tpu.memory_space<vmem>>, vector<1x1x256xf32>,
    return
  }
  func.func @transform_0(%arg0: i32) -> (i32, i32, i32) {
    %c0_i32 = arith.constant 0 : i32
    %c0_i32_0 = arith.constant 0 : i32
    %c0_i32_1 = arith.constant 0 : i32
    return %arg0, %c0_i32, %c0_i32_0 : i32, i32, i32
  }
  func.func @transform_1(%arg0: i32) -> (i32, i32, i32) {
    %c0_i32 = arith.constant 0 : i32
    %c0_i32_0 = arith.constant 0 : i32
    %c0_i32_1 = arith.constant 0 : i32
    return %arg0, %c0_i32, %c0_i32_0 : i32, i32, i32
  }
  func.func @transform_2(%arg0: i32) -> (i32, i32) {
    %c0_i32 = arith.constant 0 : i32
    %c0_i32_0 = arith.constant 0 : i32
    %c0_i32_1 = arith.constant 0 : i32
    return %c0_i32, %c0_i32_0 : i32, i32
  }
  func.func @transform_3(%arg0: i32) -> (i32, i32) {
    %c0_i32 = arith.constant 0 : i32
    %c0_i32_0 = arith.constant 0 : i32
    %c0_i32_1 = arith.constant 0 : i32
    return %c0_i32, %c0_i32_0 : i32, i32
  }
  func.func @transform_4(%arg0: i32) -> (i32, i32) {
    %c0_i32 = arith.constant 0 : i32
    %c0_i32_0 = arith.constant 0 : i32
    %c0_i32_1 = arith.constant 0 : i32
    return %c0_i32, %c0_i32_0 : i32, i32
  }
  func.func @transform_5(%arg0: i32) -> (i32, i32, i32) {
    %c0_i32 = arith.constant 0 : i32
    %c0_i32_0 = arith.constant 0 : i32
    %c0_i32_1 = arith.constant 0 : i32
    return %arg0, %c0_i32, %c0_i32_0 : i32, i32, i32
  }
  func.func @transform_6(%arg0: i32) -> (i32, i32, i32) {
    %c0_i32 = arith.constant 0 : i32
    %c0_i32_0 = arith.constant 0 : i32
    %c0_i32_1 = arith.constant 0 : i32
    return %arg0, %c0_i32, %c0_i32_0 : i32, i32, i32
  }
}

</mosaic_0001>

<llo_original>
// kernel: tpu_custom_call.1
$region0: #{tpu_custom_call.1}
  #allocation0 [shape = 'u32[]', space=smem, size = 0x4, offset = 0x4, fixed_abs, tag = 'smem constant byte address 0x4 - core index']
  #allocation1 [shape = 'u32[144,128]{1,0:T(1,128)}', space=vmem, size = 0x12000, scoped, tag = 'internal scratch']
  #allocation2 [shape = 'bf16[8,290]{1,0:T(8,128)(2,1)}', space=vmem, size = 0x1800, scoped, tag = 'scratch operand']
  #allocation3 [shape = 'f32[1,290]{1,0:T(1,128)}', space=vmem, size = 0x600, scoped, tag = 'scratch operand']
  #allocation4 [shape = 'bf16[72,256]{1,0:T(8,128)(2,1)}', space=vmem, size = 0x9000, scoped, tag = 'scratch operand']
  %s0 = inlined_call_operand.hbm [shape: f32[2,4,256], index: 0, kind: input, shape index: {}]
  %s1 = inlined_call_operand.hbm [shape: f32[2,1,256], index: 1, kind: input, shape index: {}]
  %s2 = inlined_call_operand.vmem [shape: f32[3,256], index: 2, kind: input, shape index: {}]
  %s3 = inlined_call_operand.vmem [shape: bf16[9,72], index: 3, kind: input, shape index: {}]
  %s4 = inlined_call_operand.vmem [shape: f32[8,1], index: 4, kind: input, shape index: {}]
  %s5 = inlined_call_operand.hbm [shape: f32[2,8,256], index: 5, kind: output, shape index: {0}]
  %s6 = inlined_call_operand.hbm [shape: f32[2,1,256], index: 6, kind: output, shape index: {1}]
  %7 = xla_tuple %s5, %s6
  %s8 = sld [smem:[#allocation0]]
  $region69: #{tpu_custom_call.1} parent=0
    _
  %s10 = ssub.s32 1, %s8
  %s11 = scalar_select 0, %s10, %s8
  $region1: #{tpu_custom_call.1} parent=0
    #allocation5 [shape = 'u8[8192]{0}', space=vmem, size = 0x2000, scoped, tag = 'input window, operand 0']
    #allocation6 [shape = 's32[2]{0}', space=sflag, size = 0x8, scoped, tag = 'scoped memory for tpu_custom_call.1']
    #allocation7 [shape = 's32[2]{0}', space=sflag, size = 0x8, scoped, tag = 'scoped memory for tpu_custom_call.1']
    #allocation8 [shape = 'u8[2048]{0}', space=vmem, size = 0x800, scoped, tag = 'input window, operand 1']
    #allocation9 [shape = 's32[2]{0}', space=sflag, size = 0x8, scoped, tag = 'scoped memory for tpu_custom_call.1']
    #allocation10 [shape = 'u8[16384]{0}', space=vmem, size = 0x4000, scoped, tag = 'output window, operand 0']
    #allocation11 [shape = 'u8[2048]{0}', space=vmem, size = 0x800, scoped, tag = 'output window, operand 1']
    #allocation12 [shape = 's32[2]{0}', space=sflag, size = 0x8, scoped, tag = 'scoped memory for tpu_custom_call.1']
    %12 = vsyncpa [#allocation6], 0
    %s13 = scalar_lea.sflag [#allocation6], 1
    %14 = vsyncpa %s13, 0
    %15 = vsyncpa [#allocation9], 0
    %s16 = scalar_lea.sflag [#allocation9], 1
    %17 = vsyncpa %s16, 0
    %18 = vsyncpa [#allocation7], 0
    %s19 = scalar_lea.sflag [#allocation7], 1
    %20 = vsyncpa %s19, 0
    %21 = vsyncpa [#allocation12], 0
    %s22 = scalar_lea.sflag [#allocation12], 1
    %23 = vsyncpa %s22, 0
    loop: start=0, step=1, limit=4
    $region2: #{tpu_custom_call.1} parent=1 // loop_pre_header
      _
    $region3: #{tpu_custom_call.1} parent=1 // loop_header
      %s25 = sphi 0, %s29
      %p26 = scmp.ge.s32.totalorder %s25, 4
      %s35 = sphi 0, %s37
      %s38 = sphi 0, %s35
      %s39 = sphi 0, %s38
      %s55 = sphi 0, %s39
      %s61 = sphi 0, %s63
      %s64 = sphi 0, %s61
      %s65 = sphi 0, %s64
      %s81 = sphi 0, %s65
      %s85 = sphi 0, %s85
      %s87 = sphi 0, %s85
      %s88 = sphi 0, %s87
      %s102 = sphi 0, %s88
      %s106 = sphi 0, %s106
      %s108 = sphi 0, %s106
      %s109 = sphi 0, %s108
      %s123 = sphi 0, %s109
      %s127 = sphi 0, %s127
      %s129 = sphi 0, %s127
      %s130 = sphi 0, %s129
      %s144 = sphi 0, %s130
      %s150 = sphi 0, %s152
      %s153 = sphi 0, %s150
      %s154 = sphi 0, %s153
      %s170 = sphi 0, %s154
      %s176 = sphi 0, %s178
      %s179 = sphi 0, %s176
      %s180 = sphi 0, %s179
      %s196 = sphi 0, %s180
    $region4: #{tpu_custom_call.1} parent=1 // loop_header_branch
      %28 = sbr.rel (%p26) target = $region8
    $region5: #{tpu_custom_call.1} parent=1 // loop_body
      %s30 = ssub.s32 %s25, 1
      %s31 = ssub.s32 %s25, 2
      %s32 = sadd.s32 %s25, 1
      %s33 = ssub.s32 %s25, %s32
      %p34 = scmp.eq.s32.totalorder %s33, 0
      %s36 = sadd.s32 %s35, 1
      %s37 = scalar_select %p34, %s35, %s36
      %p40 = pneg %p34
      %p41 = scmp.eq.s32.totalorder %s25, 1
      %p42 = por %p40, %p41
      %p43 = scmp.ne.s32.totalorder %s35, %s38
      %p44 = scmp.eq.s32.totalorder %s25, 0
      %p45 = por %p43, %p44
      %p46 = scmp.ne.s32.totalorder %s35, %s38
      %p47 = scmp.eq.s32.totalorder %s30, 1
      %p48 = por %p46, %p47
      %p49 = scmp.ne.s32.totalorder %s38, %s39
      %p50 = scmp.eq.s32.totalorder %s30, 0
      %p51 = por %p49, %p50
      %p52 = scmp.ne.s32.totalorder %s38, %s39
      %p53 = scmp.eq.s32.totalorder %s31, 1
      %p54 = por %p52, %p53
      %p56 = scmp.ne.s32.totalorder %s39, %s55
      %p57 = scmp.eq.s32.totalorder %s31, 0
      %p58 = por %p56, %p57
      %s59 = ssub.s32 %s25, %s32
      %p60 = scmp.eq.s32.totalorder %s59, 0
      %s62 = sadd.s32 %s61, 1
      %s63 = scalar_select %p60, %s61, %s62
      %p66 = pneg %p60
      %p67 = scmp.eq.s32.totalorder %s25, 1
      %p68 = por %p66, %p67
      %p69 = scmp.ne.s32.totalorder %s61, %s64
      %p70 = scmp.eq.s32.totalorder %s25, 0
      %p71 = por %p69, %p70
      %p72 = scmp.ne.s32.totalorder %s61, %s64
      %p73 = scmp.eq.s32.totalorder %s30, 1
      %p74 = por %p72, %p73
      %p75 = scmp.ne.s32.totalorder %s64, %s65
      %p76 = scmp.eq.s32.totalorder %s30, 0
      %p77 = por %p75, %p76
      %p78 = scmp.ne.s32.totalorder %s64, %s65
      %p79 = scmp.eq.s32.totalorder %s31, 1
      %p80 = por %p78, %p79
      %p82 = scmp.ne.s32.totalorder %s65, %s81
      %p83 = scmp.eq.s32.totalorder %s31, 0
      %p84 = por %p82, %p83
      %s86 = sadd.s32 %s85, 1
      %p89 = scmp.eq.s32.totalorder %s25, 1
      %p90 = scmp.ne.s32.totalorder %s85, %s87
      %p91 = scmp.eq.s32.totalorder %s25, 0
      %p92 = por %p90, %p91
      %p93 = scmp.ne.s32.totalorder %s85, %s87
      %p94 = scmp.eq.s32.totalorder %s30, 1
      %p95 = por %p93, %p94
      %p96 = scmp.ne.s32.totalorder %s87, %s88
      %p97 = scmp.eq.s32.totalorder %s30, 0
      %p98 = por %p96, %p97
      %p99 = scmp.ne.s32.totalorder %s87, %s88
      %p100 = scmp.eq.s32.totalorder %s31, 1
      %p101 = por %p99, %p100
      %p103 = scmp.ne.s32.totalorder %s88, %s102
      %p104 = scmp.eq.s32.totalorder %s31, 0
      %p105 = por %p103, %p104
      %s107 = sadd.s32 %s106, 1
      %p110 = scmp.eq.s32.totalorder %s25, 1
      %p111 = scmp.ne.s32.totalorder %s106, %s108
      %p112 = scmp.eq.s32.totalorder %s25, 0
      %p113 = por %p111, %p112
      %p114 = scmp.ne.s32.totalorder %s106, %s108
      %p115 = scmp.eq.s32.totalorder %s30, 1
      %p116 = por %p114, %p115
      %p117 = scmp.ne.s32.totalorder %s108, %s109
      %p118 = scmp.eq.s32.totalorder %s30, 0
      %p119 = por %p117, %p118
      %p120 = scmp.ne.s32.totalorder %s108, %s109
      %p121 = scmp.eq.s32.totalorder %s31, 1
      %p122 = por %p120, %p121
      %p124 = scmp.ne.s32.totalorder %s109, %s123
      %p125 = scmp.eq.s32.totalorder %s31, 0
      %p126 = por %p124, %p125
      %s128 = sadd.s32 %s127, 1
      %p131 = scmp.eq.s32.totalorder %s25, 1
      %p132 = scmp.ne.s32.totalorder %s127, %s129
      %p133 = scmp.eq.s32.totalorder %s25, 0
      %p134 = por %p132, %p133
      %p135 = scmp.ne.s32.totalorder %s127, %s129
      %p136 = scmp.eq.s32.totalorder %s30, 1
      %p137 = por %p135, %p136
      %p138 = scmp.ne.s32.totalorder %s129, %s130
      %p139 = scmp.eq.s32.totalorder %s30, 0
      %p140 = por %p138, %p139
      %p141 = scmp.ne.s32.totalorder %s129, %s130
      %p142 = scmp.eq.s32.totalorder %s31, 1
      %p143 = por %p141, %p142
      %p145 = scmp.ne.s32.totalorder %s130, %s144
      %p146 = scmp.eq.s32.totalorder %s31, 0
      %p147 = por %p145, %p146
      %s148 = ssub.s32 %s25, %s32
      %p149 = scmp.eq.s32.totalorder %s148, 0
      %s151 = sadd.s32 %s150, 1
      %s152 = scalar_select %p149, %s150, %s151
      %p155 = pneg %p149
      %p156 = scmp.eq.s32.totalorder %s25, 1
      %p157 = por %p155, %p156
      %p158 = scmp.ne.s32.totalorder %s150, %s153
      %p159 = scmp.eq.s32.totalorder %s25, 0
      %p160 = por %p158, %p159
      %p161 = scmp.ne.s32.totalorder %s150, %s153
      %p162 = scmp.eq.s32.totalorder %s30, 1
      %p163 = por %p161, %p162
      %p164 = scmp.ne.s32.totalorder %s153, %s154
      %p165 = scmp.eq.s32.totalorder %s30, 0
      %p166 = por %p164, %p165
      %p167 = scmp.ne.s32.totalorder %s153, %s154
      %p168 = scmp.eq.s32.totalorder %s31, 1
      %p169 = por %p167, %p168
      %p171 = scmp.ne.s32.totalorder %s154, %s170
      %p172 = scmp.eq.s32.totalorder %s31, 0
      %p173 = por %p171, %p172
      %s174 = ssub.s32 %s25, %s32
      %p175 = scmp.eq.s32.totalorder %s174, 0
      %s177 = sadd.s32 %s176, 1
      %s178 = scalar_select %p175, %s176, %s177
      %p181 = pneg %p175
      %p182 = scmp.eq.s32.totalorder %s25, 1
      %p183 = por %p181, %p182
      %p184 = scmp.ne.s32.totalorder %s176, %s179
      %p185 = scmp.eq.s32.totalorder %s25, 0
      %p186 = por %p184, %p185
      %p187 = scmp.ne.s32.totalorder %s176, %s179
      %p188 = scmp.eq.s32.totalorder %s30, 1
      %p189 = por %p187, %p188
      %p190 = scmp.ne.s32.totalorder %s179, %s180
      %p191 = scmp.eq.s32.totalorder %s30, 0
      %p192 = por %p190, %p191
      %p193 = scmp.ne.s32.totalorder %s179, %s180
      %p194 = scmp.eq.s32.totalorder %s31, 1
      %p195 = por %p193, %p194
      %p197 = scmp.ne.s32.totalorder %s180, %s196
      %p198 = scmp.eq.s32.totalorder %s31, 0
      %p199 = por %p197, %p198
      %p200 = scmp.le.s32.totalorder 1, %s25
      %p201 = scmp.lt.s32.totalorder %s25, 3
      %p202 = pnand %p200, %p201
      %p203 = pneg %p202
      // Predicated region
      $region9: #{tpu_custom_call.1} parent=5 // pred_check
        _
      $region10: #{tpu_custom_call.1} parent=5 // pred_check_branch
        %205 = sbr.rel (%p202) target = $region12
      $region11: #{tpu_custom_call.1} parent=5 // pred_region
        %s206 = ssub.s32 %s25, 1
        // Predicated region
        $region13: #{tpu_custom_call.1} parent=11 // pred_check
          %p207 = pneg %p98
        $region14: #{tpu_custom_call.1} parent=11 // pred_check_branch
          %209 = sbr.rel (%p207) target = $region16
        $region15: #{tpu_custom_call.1} parent=11 // pred_region
          _
        $region16: #{tpu_custom_call.1} parent=11 // pred_fallthru
          _
        // Predicated region
        $region17: #{tpu_custom_call.1} parent=11 // pred_check
          %p210 = pneg %p119
        $region18: #{tpu_custom_call.1} parent=11 // pred_check_branch
          %212 = sbr.rel (%p210) target = $region20
        $region19: #{tpu_custom_call.1} parent=11 // pred_region
          _
        $region20: #{tpu_custom_call.1} parent=11 // pred_fallthru
          _
        // Predicated region
        $region21: #{tpu_custom_call.1} parent=11 // pred_check
          %p213 = pneg %p140
        $region22: #{tpu_custom_call.1} parent=11 // pred_check_branch
          %215 = sbr.rel (%p213) target = $region24
        $region23: #{tpu_custom_call.1} parent=11 // pred_region
          _
        $region24: #{tpu_custom_call.1} parent=11 // pred_fallthru
          _
      $region12: #{tpu_custom_call.1} parent=5 // pred_fallthru
        _
      %p216 = scmp.lt.s32.totalorder %s25, 2
      // Predicated region
      $region25: #{tpu_custom_call.1} parent=5 // pred_check
        %p217 = pneg %p216
      $region26: #{tpu_custom_call.1} parent=5 // pred_check_branch
        %219 = sbr.rel (%p217) target = $region28
      $region27: #{tpu_custom_call.1} parent=5 // pred_region
        // Predicated region
        $region29: #{tpu_custom_call.1} parent=27 // pred_check
          %p220 = pneg %p45
        $region30: #{tpu_custom_call.1} parent=27 // pred_check_branch
          %222 = sbr.rel (%p220) target = $region32
        $region31: #{tpu_custom_call.1} parent=27 // pred_region
          %s223 = sand.u32 %s35, 1
          %s224 = scalar_lea.sflag [#allocation6], %s223
          %s225 = sand.u32 %s35, 1
          %s226 = smul.addr %s225, 8
          %s227 = scalar_lea.vmem [#allocation5], %s226
          %s229 = ssub.s32 128, 128
          %230 = vsyncadd %s224, %s229
          %s231 = smul.addr %s25, 2
          %s232 = smul.addr %s231, 64
          %s233 = scalar_lea.hbm %s0, %s232
          %s235 = sshll.u32 %s227, 4
          %s236 = int_to_ptr.vmem [resolvable:$true] %s235
          %238 = dma.hbm_to_vmem [thread:$0]  %s233, 128, %s236, %s224
        $region32: #{tpu_custom_call.1} parent=27 // pred_fallthru
          _
        // Predicated region
        $region33: #{tpu_custom_call.1} parent=27 // pred_check
          %p239 = pneg %p71
        $region34: #{tpu_custom_call.1} parent=27 // pred_check_branch
          %241 = sbr.rel (%p239) target = $region36
        $region35: #{tpu_custom_call.1} parent=27 // pred_region
          %s242 = sand.u32 %s61, 1
          %s243 = scalar_lea.sflag [#allocation9], %s242
          %s244 = sand.u32 %s61, 1
          %s245 = smul.addr %s244, 2
          %s246 = scalar_lea.vmem [#allocation8], %s245
          %s248 = ssub.s32 32, 32
          %249 = vsyncadd %s243, %s248
          %s250 = smul.addr %s25, 2
          %s251 = smul.addr %s250, 16
          %s252 = scalar_lea.hbm %s1, %s251
          %s254 = sshll.u32 %s246, 4
          %s255 = int_to_ptr.vmem [resolvable:$true] %s254
          %257 = dma.hbm_to_vmem [thread:$0]  %s252, 32, %s255, %s243
        $region36: #{tpu_custom_call.1} parent=27 // pred_fallthru
          _
      $region28: #{tpu_custom_call.1} parent=5 // pred_fallthru
        _
      %p258 = scmp.le.s32.totalorder 1, %s25
      %p259 = scmp.lt.s32.totalorder %s25, 3
      %p260 = pnand %p258, %p259
      %p261 = pneg %p260
      // Predicated region
      $region37: #{tpu_custom_call.1} parent=5 // pred_check
        _
      $region38: #{tpu_custom_call.1} parent=5 // pred_check_branch
        %263 = sbr.rel (%p260) target = $region40
      $region39: #{tpu_custom_call.1} parent=5 // pred_region
        %s264 = ssub.s32 %s25, 1
        %s265 = sand.u32 %s38, 1
        %s266 = scalar_lea.sflag [#allocation6], %s265
        %s267 = sand.u32 %s38, 1
        %s268 = smul.addr %s267, 8
        %s269 = scalar_lea.vmem [#allocation5], %s268
        // Predicated region
        $region41: #{tpu_custom_call.1} parent=39 // pred_check
          %p270 = pneg %p51
        $region42: #{tpu_custom_call.1} parent=39 // pred_check_branch
          %272 = sbr.rel (%p270) target = $region44
        $region43: #{tpu_custom_call.1} parent=39 // pred_region
          %273 = dma.done %s266, 128
        $region44: #{tpu_custom_call.1} parent=39 // pred_fallthru
          _
        %s274 = sand.u32 %s64, 1
        %s275 = scalar_lea.sflag [#allocation9], %s274
        %s276 = sand.u32 %s64, 1
        %s277 = smul.addr %s276, 2
        %s278 = scalar_lea.vmem [#allocation8], %s277
        // Predicated region
        $region45: #{tpu_custom_call.1} parent=39 // pred_check
          %p279 = pneg %p77
        $region46: #{tpu_custom_call.1} parent=39 // pred_check_branch
          %281 = sbr.rel (%p279) target = $region48
        $region47: #{tpu_custom_call.1} parent=39 // pred_region
          %282 = dma.done %s275, 32
        $region48: #{tpu_custom_call.1} parent=39 // pred_fallthru
          _
        %s283 = sand.u32 %s38, 1
        %s284 = scalar_lea.sflag [#allocation6], %s283
        %s285 = sand.u32 %s38, 1
        %s286 = smul.addr %s285, 8
        %s287 = scalar_lea.vmem [#allocation5], %s286
        %p288 = pneg %p51
        %p289 = pneg %p48
        %s290 = sand.u32 %s64, 1
        %s291 = scalar_lea.sflag [#allocation9], %s290
        %s292 = sand.u32 %s64, 1
        %s293 = smul.addr %s292, 2
        %s294 = scalar_lea.vmem [#allocation8], %s293
        %p295 = pneg %p77
        %p296 = pneg %p74
        %p297 = pneg %p98
        %p298 = pneg %p95
        %p299 = pneg %p119
        %p300 = pneg %p116
        %p301 = pneg %p140
        %p302 = pneg %p137
        %p303 = pneg %p166
        %p304 = pneg %p163
        %s305 = sand.u32 %s153, 1
        %s306 = scalar_lea.sflag [#allocation7], %s305
        %s307 = sand.u32 %s153, 1
        %s308 = smul.addr %s307, 16
        %s309 = scalar_lea.vmem [#allocation10], %s308
        %p310 = pneg %p192
        %p311 = pneg %p189
        %s312 = sand.u32 %s179, 1
        %s313 = scalar_lea.sflag [#allocation12], %s312
        %s314 = sand.u32 %s179, 1
        %s315 = smul.addr %s314, 2
        %s316 = scalar_lea.vmem [#allocation11], %s315
        %318 = vst [vmem:[#allocation2] sm:$0xff] 0
        %vm319 = vcmask 273408
        %320 = vst.msk [vmem:[#allocation2 + $0x8] sm:$0xf] %vm319, 0
        %v321 = vlaneseq
        %vm322 = vcmp.ge.s32.totalorder %v321, 0
        %vm323 = vcmp.lt.s32.totalorder %v321, 290
        %vm324 = vmand %vm322, %vm323
        %325 = vst.msk [vmem:[#allocation3] sm:$0x7] %vm324, 0.0
        %v326 = vld [vmem:[%s278] sm:$0x3]
        %v327 = vld [vmem:[%s269] sm:$0xff]
        %v329 = vlaneseq
        %v330 = vshrl.u32 %v329, 7
        %v331 = vsub.s32 0, %v330
        %v332 = vrot.slane %v326, %v331
        %v333 = vlaneseq
        %v334 = vshrl.u32 %v333, 7
        %v335 = vsub.s32 1, %v334
        %v336 = vrot.slane %v326, %v335
        %v337 = vcombine.low %v332, %v336
        %v339 = vmul.f32 %v327, %v337
        %v341 = vcombine.high %v339, %v339
        %v343 = vpack.c.bf16 %v339, %v339
        %v344 = vpack.c.bf16 %v341, %v341
        %v347 = vunpack.c.l.b16 %v343
        %v348 = vunpack.c.l.b16 %v344
        %v349 = vpack.c.b16 %v348, %v347
        %350 = vrot.lane.b32.xlu0 %v349, 17
        %v351 = vpop.permute.xlu0 %350
        %v352 = vrot.slane %v351, 4
        %vm353 = vcmask 138240
        %v354 = vsel %vm353, %v352, %v351
        %vm357 = vcmask 1041544
        %vm358 = vcmask 1045508
        %vm359 = vmor %vm358, %vm357
        %360 = vst.msk [vmem:[#allocation2] sm:$0x33] %vm359, %v354
        %vm361 = vcmask 132096
        %362 = vst.msk [vmem:[#allocation2 + $0x8] sm:$0x3] %vm361, %v352
        %v365 = vpack.c.bf16 %v332, %v332
        %v366 = vpack.c.bf16 %v336, %v336
        %v369 = vunpack.c.l.b16 %v365
        %v370 = vunpack.c.l.b16 %v366
        %v371 = vpack.c.b16 %v370, %v369
        %v372 = vrot.slane %v371, 6
        %373 = vrot.lane.b32.xlu0 %v372, 17
        %v374 = vpop.permute.xlu0 %373
        %v375 = vrot.slane %v374, 4
        %v376 = vsel %vm353, %v375, %v374
        %vm379 = vcmask 1042570
        %vm380 = vsmask.f32 2304
        %vm381 = vmand %vm379, %vm380
        %vm382 = vcmask 1046534
        %vm383 = vsmask.f32 6400
        %vm384 = vmand %vm382, %vm383
        %vm385 = vmor %vm384, %vm381
        %v386 = vld [vmem:[#allocation2] sm:$0x44]
        %v387 = vsel %vm385, %v376, %v386
        %388 = vst [vmem:[#allocation2] sm:$0x44] %v387
        %vm389 = vcmask 133122
        %vm390 = vmand %vm389, %vm380
        %v391 = vld [vmem:[#allocation2 + $0x8] sm:$0x4]
        %v392 = vsel %vm390, %v375, %v391
        %393 = vst [vmem:[#allocation2 + $0x8] sm:$0x4] %v392
        %394 = vrot.lane.b32.xlu0 %v326, 17
        %v395 = vpop.permute.xlu0 %394
        %v396 = vrot.slane %v395, 7
        %vm397 = vcmask 138240
        %v398 = vsel %vm397, %v396, %v395
        %vm400 = vcmp.ge.s32.totalorder %v321, 17
        %vm401 = vcmp.lt.s32.totalorder %v321, 273
        %vm402 = vmand %vm400, %vm401
        %403 = vst.msk [vmem:[#allocation3] sm:$0x7] %vm402, %v398
        %v404 = vld [vmem:[#allocation2] sm:$0xff]
        %v405 = vld [vmem:[#allocation3] sm:$0x3]
        %v406 = vld [vmem:[%s2] ss:$4 sm:$0x3]
        %v408 = vlaneseq
        %v409 = vshrl.u32 %v408, 7
        %v410 = vsub.s32 0, %v409
        %v411 = vrot.slane %v406, %v410
        %v412 = vlaneseq
        %v413 = vshrl.u32 %v412, 7
        %v414 = vsub.s32 1, %v413
        %v415 = vrot.slane %v406, %v414
        %v418 = vpack.c.bf16 %v411, %v411
        %v419 = vpack.c.bf16 %v415, %v415
        %v421 = vpack.i.b16 %v418, %v418
        %v423 = vlaneseq
        %v424 = vshrl.u32 %v423, 7
        %v425 = vsub.s32 0, %v424
        %v426 = vrot.slane %v421, %v425
        %v428 = vpack.i.b16 %v419, %v419
        %v430 = vlaneseq
        %v431 = vshrl.u32 %v430, 7
        %v432 = vsub.s32 0, %v431
        %v433 = vrot.slane %v428, %v432
        %v436 = vunpack.c.l.b16 %v426
        %v437 = vunpack.c.l.b16 %v433
        %v438 = vpack.c.b16 %v437, %v436
        %v440 = vmul.bf16 %v404, %v438
        %v441 = vmul.f32 %v405, %v406
        %442 = vst [vmem:[#allocation4] sm:$0xff] %v440
        %v443 = vld [vmem:[#allocation2] sm:$0xff]
        %v444 = vld [vmem:[#allocation2 + $0x8] sm:$0xf]
        %v445 = vld [vmem:[#allocation3] sm:$0x7]
        %448 = vrot.lane.b32.xlu0 %v443, 127
        %v449 = vpop.permute.xlu0 %448
        %450 = vrot.lane.b32.xlu0 %v444, 127
        %v451 = vpop.permute.xlu0 %450
        %v452 = vrot.slane %v449, 4
        %v453 = vrot.slane %v451, 4
        %vm454 = vcmask 1043456
        %v455 = vsel %vm454, %v452, %v453
        %vm456 = vcmask 1039360
        %v457 = vsel %vm456, %v449, %v455
        %459 = vst [vmem:[#allocation4 + $0x8] sm:$0xff] %v457
        %461 = vrot.lane.b32.xlu0 %v445, 127
        %v462 = vpop.permute.xlu0 %461
        %v463 = vrot.slane %v462, 1
        %vm464 = vcmask 1039360
        %v465 = vsel %vm464, %v462, %v463
        %v467 = vmax.f32 %v441, %v465
        %v468 = vld [vmem:[#allocation2] sm:$0xff]
        %v469 = vld [vmem:[#allocation2 + $0x8] sm:$0xf]
        %v470 = vld [vmem:[#allocation3] sm:$0x7]
        %s471 = scalar_lea.vmem %s2, 2
        %v472 = vld [vmem:[%s471] ss:$4 sm:$0x3]
        %v474 = vlaneseq
        %v475 = vshrl.u32 %v474, 7
        %v476 = vsub.s32 0, %v475
        %v477 = vrot.slane %v472, %v476
        %v478 = vlaneseq
        %v479 = vshrl.u32 %v478, 7
        %v480 = vsub.s32 1, %v479
        %v481 = vrot.slane %v472, %v480
        %v484 = vpack.c.bf16 %v477, %v477
        %v485 = vpack.c.bf16 %v481, %v481
        %v487 = vpack.i.b16 %v484, %v484
        %v489 = vlaneseq
        %v490 = vshrl.u32 %v489, 7
        %v491 = vsub.s32 0, %v490
        %v492 = vrot.slane %v487, %v491
        %v494 = vpack.i.b16 %v485, %v485
        %v496 = vlaneseq
        %v497 = vshrl.u32 %v496, 7
        %v498 = vsub.s32 0, %v497
        %v499 = vrot.slane %v494, %v498
        %v502 = vunpack.c.l.b16 %v492
        %v503 = vunpack.c.l.b16 %v499
        %v504 = vpack.c.b16 %v503, %v502
        %505 = vrot.lane.b32.xlu0 %v504, 2
        %v506 = vpop.permute.xlu0 %505
        %v507 = vrot.slane %v506, 4
        %vm508 = vcmask 15360
        %v509 = vsel %vm508, %v507, %v506
        %v512 = vmul.bf16 %v468, %v509
        %v513 = vmul.bf16 %v469, %v507
        %514 = vrot.lane.b32.xlu0 %v472, 2
        %v515 = vpop.permute.xlu0 %514
        %v516 = vrot.slane %v515, 7
        %vm517 = vcmask 15360
        %v518 = vsel %vm517, %v516, %v515
        %v520 = vmul.f32 %v470, %v518
        %523 = vrot.lane.b32.xlu0 %v512, 126
        %v524 = vpop.permute.xlu0 %523
        %525 = vrot.lane.b32.xlu0 %v513, 126
        %v526 = vpop.permute.xlu0 %525
        %v527 = vrot.slane %v524, 4
        %v528 = vrot.slane %v526, 4
        %v529 = vsel %vm454, %v527, %v528
        %vm530 = vcmask 1031168
        %v531 = vsel %vm530, %v524, %v529
        %533 = vst [vmem:[#allocation4 + $0x10] sm:$0xff] %v531
        %535 = vrot.lane.b32.xlu0 %v520, 126
        %v536 = vpop.permute.xlu0 %535
        %v537 = vrot.slane %v536, 1
        %vm538 = vcmask 1031168
        %v539 = vsel %vm538, %v536, %v537
        %v541 = vmax.f32 %v467, %v539
        %v542 = vld [vmem:[#allocation2] sm:$0xff]
        %v543 = vld [vmem:[#allocation2 + $0x8] sm:$0xf]
        %v544 = vld [vmem:[#allocation3] sm:$0x7]
        %v545 = vld [vmem:[%s2] ss:$4 sm:$0x3]
        %v547 = vlaneseq
        %v548 = vshrl.u32 %v547, 7
        %v549 = vsub.s32 0, %v548
        %v550 = vrot.slane %v545, %v549
        %v551 = vlaneseq
        %v552 = vshrl.u32 %v551, 7
        %v553 = vsub.s32 1, %v552
        %v554 = vrot.slane %v545, %v553
        %v557 = vpack.c.bf16 %v550, %v550
        %v558 = vpack.c.bf16 %v554, %v554
        %v560 = vpack.i.b16 %v557, %v557
        %v562 = vlaneseq
        %v563 = vshrl.u32 %v562, 7
        %v564 = vsub.s32 0, %v563
        %v565 = vrot.slane %v560, %v564
        %v567 = vpack.i.b16 %v558, %v558
        %v569 = vlaneseq
        %v570 = vshrl.u32 %v569, 7
        %v571 = vsub.s32 0, %v570
        %v572 = vrot.slane %v567, %v571
        %v575 = vunpack.c.l.b16 %v565
        %v576 = vunpack.c.l.b16 %v572
        %v577 = vpack.c.b16 %v576, %v575
        %578 = vrot.lane.b32.xlu0 %v577, 16
        %v579 = vpop.permute.xlu0 %578
        %v580 = vrot.slane %v579, 4
        %vm581 = vcmask 130048
        %v582 = vsel %vm581, %v580, %v579
        %v585 = vmul.bf16 %v542, %v582
        %v586 = vmul.bf16 %v543, %v580
        %587 = vrot.lane.b32.xlu0 %v545, 16
        %v588 = vpop.permute.xlu0 %587
        %v589 = vrot.slane %v588, 7
        %vm590 = vcmask 130048
        %v591 = vsel %vm590, %v589, %v588
        %v593 = vmul.f32 %v544, %v591
        %596 = vrot.lane.b32.xlu0 %v585, 112
        %v597 = vpop.permute.xlu0 %596
        %598 = vrot.lane.b32.xlu0 %v586, 112
        %v599 = vpop.permute.xlu0 %598
        %v600 = vrot.slane %v597, 4
        %v601 = vrot.slane %v599, 4
        %v602 = vsel %vm454, %v600, %v601
        %vm603 = vcmask 916480
        %v604 = vsel %vm603, %v597, %v602
        %606 = vst [vmem:[#allocation4 + $0x18] sm:$0xff] %v604
        %608 = vrot.lane.b32.xlu0 %v593, 112
        %v609 = vpop.permute.xlu0 %608
        %v610 = vrot.slane %v609, 1
        %vm611 = vcmask 916480
        %v612 = vsel %vm611, %v609, %v610
        %v614 = vmax.f32 %v541, %v612
        %v615 = vld [vmem:[#allocation2] sm:$0xff]
        %v616 = vld [vmem:[#allocation2 + $0x8] sm:$0xf]
        %v617 = vld [vmem:[#allocation3] sm:$0x7]
        %620 = vrot.lane.b32.xlu0 %v615, 111
        %v621 = vpop.permute.xlu0 %620
        %622 = vrot.lane.b32.xlu0 %v616, 111
        %v623 = vpop.permute.xlu0 %622
        %v624 = vrot.slane %v621, 4
        %v625 = vrot.slane %v623, 4
        %v626 = vsel %vm454, %v624, %v625
        %vm627 = vcmask 908288
        %v628 = vsel %vm627, %v621, %v626
        %630 = vst [vmem:[#allocation4 + $0x20] sm:$0xff] %v628
        %632 = vrot.lane.b32.xlu0 %v617, 111
        %v633 = vpop.permute.xlu0 %632
        %v634 = vrot.slane %v633, 1
        %vm635 = vcmask 908288
        %v636 = vsel %vm635, %v633, %v634
        %v638 = vmax.f32 %v614, %v636
        %v639 = vld [vmem:[#allocation2] sm:$0xff]
        %v640 = vld [vmem:[#allocation2 + $0x8] sm:$0xf]
        %v641 = vld [vmem:[#allocation3] sm:$0x7]
        %v642 = vld [vmem:[%s471] ss:$4 sm:$0x3]
        %v644 = vlaneseq
        %v645 = vshrl.u32 %v644, 7
        %v646 = vsub.s32 0, %v645
        %v647 = vrot.slane %v642, %v646
        %v648 = vlaneseq
        %v649 = vshrl.u32 %v648, 7
        %v650 = vsub.s32 1, %v649
        %v651 = vrot.slane %v642, %v650
        %v654 = vpack.c.bf16 %v647, %v647
        %v655 = vpack.c.bf16 %v651, %v651
        %v657 = vpack.i.b16 %v654, %v654
        %v659 = vlaneseq
        %v660 = vshrl.u32 %v659, 7
        %v661 = vsub.s32 0, %v660
        %v662 = vrot.slane %v657, %v661
        %v664 = vpack.i.b16 %v655, %v655
        %v666 = vlaneseq
        %v667 = vshrl.u32 %v666, 7
        %v668 = vsub.s32 0, %v667
        %v669 = vrot.slane %v664, %v668
        %v672 = vunpack.c.l.b16 %v662
        %v673 = vunpack.c.l.b16 %v669
        %v674 = vpack.c.b16 %v673, %v672
        %675 = vrot.lane.b32.xlu0 %v674, 18
        %v676 = vpop.permute.xlu0 %675
        %v677 = vrot.slane %v676, 4
        %vm678 = vcmask 146432
        %v679 = vsel %vm678, %v677, %v676
        %v682 = vmul.bf16 %v639, %v679
        %v683 = vmul.bf16 %v640, %v677
        %684 = vrot.lane.b32.xlu0 %v642, 18
        %v685 = vpop.permute.xlu0 %684
        %v686 = vrot.slane %v685, 7
        %vm687 = vcmask 146432
        %v688 = vsel %vm687, %v686, %v685
        %v690 = vmul.f32 %v641, %v688
        %693 = vrot.lane.b32.xlu0 %v682, 110
        %v694 = vpop.permute.xlu0 %693
        %695 = vrot.lane.b32.xlu0 %v683, 110
        %v696 = vpop.permute.xlu0 %695
        %v697 = vrot.slane %v694, 4
        %v698 = vrot.slane %v696, 4
        %v699 = vsel %vm454, %v697, %v698
        %vm700 = vcmask 900096
        %v701 = vsel %vm700, %v694, %v699
        %703 = vst [vmem:[#allocation4 + $0x28] sm:$0xff] %v701
        %705 = vrot.lane.b32.xlu0 %v690, 110
        %v706 = vpop.permute.xlu0 %705
        %v707 = vrot.slane %v706, 1
        %vm708 = vcmask 900096
        %v709 = vsel %vm708, %v706, %v707
        %v711 = vmax.f32 %v638, %v709
        %v712 = vld [vmem:[#allocation2] sm:$0xff]
        %v713 = vld [vmem:[#allocation2 + $0x8] sm:$0xf]
        %v714 = vld [vmem:[#allocation3] sm:$0x7]
        %v715 = vld [vmem:[%s2] ss:$4 sm:$0x3]
        %v717 = vlaneseq
        %v718 = vshrl.u32 %v717, 7
        %v719 = vsub.s32 0, %v718
        %v720 = vrot.slane %v715, %v719
        %v721 = vlaneseq
        %v722 = vshrl.u32 %v721, 7
        %v723 = vsub.s32 1, %v722
        %v724 = vrot.slane %v715, %v723
        %v727 = vpack.c.bf16 %v720, %v720
        %v728 = vpack.c.bf16 %v724, %v724
        %v730 = vpack.i.b16 %v727, %v727
        %v732 = vlaneseq
        %v733 = vshrl.u32 %v732, 7
        %v734 = vsub.s32 0, %v733
        %v735 = vrot.slane %v730, %v734
        %v737 = vpack.i.b16 %v728, %v728
        %v739 = vlaneseq
        %v740 = vshrl.u32 %v739, 7
        %v741 = vsub.s32 0, %v740
        %v742 = vrot.slane %v737, %v741
        %v745 = vunpack.c.l.b16 %v735
        %v746 = vunpack.c.l.b16 %v742
        %v747 = vpack.c.b16 %v746, %v745
        %748 = vrot.lane.b32.xlu0 %v747, 32
        %v749 = vpop.permute.xlu0 %748
        %v750 = vrot.slane %v749, 4
        %vm751 = vcmask 261120
        %v752 = vsel %vm751, %v750, %v749
        %v755 = vmul.bf16 %v712, %v752
        %v756 = vmul.bf16 %v713, %v750
        %757 = vrot.lane.b32.xlu0 %v715, 32
        %v758 = vpop.permute.xlu0 %757
        %v759 = vrot.slane %v758, 7
        %vm760 = vcmask 261120
        %v761 = vsel %vm760, %v759, %v758
        %v763 = vmul.f32 %v714, %v761
        %766 = vrot.lane.b32.xlu0 %v755, 96
        %v767 = vpop.permute.xlu0 %766
        %768 = vrot.lane.b32.xlu0 %v756, 96
        %v769 = vpop.permute.xlu0 %768
        %v770 = vrot.slane %v767, 4
        %v771 = vrot.slane %v769, 4
        %v772 = vsel %vm454, %v770, %v771
        %vm773 = vcmask 785408
        %v774 = vsel %vm773, %v767, %v772
        %776 = vst [vmem:[#allocation4 + $0x30] sm:$0xff] %v774
        %778 = vrot.lane.b32.xlu0 %v763, 96
        %v779 = vpop.permute.xlu0 %778
        %v780 = vrot.slane %v779, 1
        %vm781 = vcmask 785408
        %v782 = vsel %vm781, %v779, %v780
        %v784 = vmax.f32 %v711, %v782
        %v785 = vld [vmem:[#allocation2] sm:$0xff]
        %v786 = vld [vmem:[#allocation2 + $0x8] sm:$0xf]
        %v787 = vld [vmem:[#allocation3] sm:$0x7]
        %790 = vrot.lane.b32.xlu0 %v785, 95
        %v791 = vpop.permute.xlu0 %790
        %792 = vrot.lane.b32.xlu0 %v786, 95
        %v793 = vpop.permute.xlu0 %792
        %v794 = vrot.slane %v791, 4
        %v795 = vrot.slane %v793, 4
        %v796 = vsel %vm454, %v794, %v795
        %vm797 = vcmask 777216
        %v798 = vsel %vm797, %v791, %v796
        %800 = vst [vmem:[#allocation4 + $0x38] sm:$0xff] %v798
        %802 = vrot.lane.b32.xlu0 %v787, 95
        %v803 = vpop.permute.xlu0 %802
        %v804 = vrot.slane %v803, 1
        %vm805 = vcmask 777216
        %v806 = vsel %vm805, %v803, %v804
        %v808 = vmax.f32 %v784, %v806
        %v809 = vld [vmem:[#allocation2] sm:$0xff]
        %v810 = vld [vmem:[#allocation2 + $0x8] sm:$0xf]
        %v811 = vld [vmem:[#allocation3] sm:$0x7]
        %v812 = vld [vmem:[%s471] ss:$4 sm:$0x3]
        %v814 = vlaneseq
        %v815 = vshrl.u32 %v814, 7
        %v816 = vsub.s32 0, %v815
        %v817 = vrot.slane %v812, %v816
        %v818 = vlaneseq
        %v819 = vshrl.u32 %v818, 7
        %v820 = vsub.s32 1, %v819
        %v821 = vrot.slane %v812, %v820
        %v824 = vpack.c.bf16 %v817, %v817
        %v825 = vpack.c.bf16 %v821, %v821
        %v827 = vpack.i.b16 %v824, %v824
        %v829 = vlaneseq
        %v830 = vshrl.u32 %v829, 7
        %v831 = vsub.s32 0, %v830
        %v832 = vrot.slane %v827, %v831
        %v834 = vpack.i.b16 %v825, %v825
        %v836 = vlaneseq
        %v837 = vshrl.u32 %v836, 7
        %v838 = vsub.s32 0, %v837
        %v839 = vrot.slane %v834, %v838
        %v842 = vunpack.c.l.b16 %v832
        %v843 = vunpack.c.l.b16 %v839
        %v844 = vpack.c.b16 %v843, %v842
        %845 = vrot.lane.b32.xlu0 %v844, 34
        %v846 = vpop.permute.xlu0 %845
        %v847 = vrot.slane %v846, 4
        %vm848 = vcmask 277504
        %v849 = vsel %vm848, %v847, %v846
        %v852 = vmul.bf16 %v809, %v849
        %v853 = vmul.bf16 %v810, %v847
        %854 = vrot.lane.b32.xlu0 %v812, 34
        %v855 = vpop.permute.xlu0 %854
        %v856 = vrot.slane %v855, 7
        %vm857 = vcmask 277504
        %v858 = vsel %vm857, %v856, %v855
        %v860 = vmul.f32 %v811, %v858
        %863 = vrot.lane.b32.xlu0 %v852, 94
        %v864 = vpop.permute.xlu0 %863
        %865 = vrot.lane.b32.xlu0 %v853, 94
        %v866 = vpop.permute.xlu0 %865
        %v867 = vrot.slane %v864, 4
        %v868 = vrot.slane %v866, 4
        %v869 = vsel %vm454, %v867, %v868
        %vm870 = vcmask 769024
        %v871 = vsel %vm870, %v864, %v869
        %873 = vst [vmem:[#allocation4 + $0x40] sm:$0xff] %v871
        %875 = vrot.lane.b32.xlu0 %v860, 94
        %v876 = vpop.permute.xlu0 %875
        %v877 = vrot.slane %v876, 1
        %vm878 = vcmask 769024
        %v879 = vsel %vm878, %v876, %v877
        %v881 = vmax.f32 %v808, %v879
        %v882 = vld [vmem:[%s3] sm:$0xf]
        %v883 = vld [vmem:[%s3 + $0x4] sm:$0x1]
        %v884 = vld [vmem:[#allocation4] sm:$0xff]
        %v885 = vld [vmem:[#allocation4 + $0x8] sm:$0xff]
        %v886 = vld [vmem:[#allocation4 + $0x10] sm:$0xff]
        %v887 = vld [vmem:[#allocation4 + $0x18] sm:$0xff]
        %v888 = vld [vmem:[#allocation4 + $0x20] sm:$0xff]
        %v889 = vld [vmem:[#allocation4 + $0x28] sm:$0xff]
        %v890 = vld [vmem:[#allocation4 + $0x30] sm:$0xff]
        %v891 = vld [vmem:[#allocation4 + $0x38] sm:$0xff]
        %v892 = vld [vmem:[#allocation4 + $0x40] sm:$0xff]
        %v895 = vunpack.c.l.b16 %v882
        %v896 = vunpack.c.l.b16 %v883
        %v897 = vpack.c.b16 %v896, %v895
        %v907 = vunpack.c.l.b16 %v884
        %v908 = vunpack.c.h.b16 %v884
        %v909 = vunpack.c.l.b16 %v885
        %v910 = vunpack.c.h.b16 %v885
        %v911 = vunpack.c.l.b16 %v886
        %v912 = vunpack.c.h.b16 %v886
        %v913 = vunpack.c.l.b16 %v887
        %v914 = vunpack.c.h.b16 %v887
        %v915 = vunpack.c.l.b16 %v888
        %v916 = vunpack.c.h.b16 %v888
        %v917 = vunpack.c.l.b16 %v889
        %v918 = vunpack.c.h.b16 %v889
        %v919 = vunpack.c.l.b16 %v890
        %v920 = vunpack.c.h.b16 %v890
        %v921 = vunpack.c.l.b16 %v891
        %v922 = vunpack.c.h.b16 %v891
        %v923 = vunpack.c.l.b16 %v892
        %v924 = vunpack.c.h.b16 %v892
        %v925 = vpack.c.b16 %v909, %v907
        %v926 = vpack.c.b16 %v910, %v908
        %v927 = vpack.c.b16 %v913, %v911
        %v928 = vpack.c.b16 %v914, %v912
        %v929 = vpack.c.b16 %v917, %v915
        %v930 = vpack.c.b16 %v918, %v916
        %v931 = vpack.c.b16 %v921, %v919
        %v932 = vpack.c.b16 %v922, %v920
        %v933 = vpack.c.b16 %v923, %v923
        %v934 = vpack.c.b16 %v924, %v924
        %vm943 = vcmask 588800
        %v945 = vsel %vm943, %v897, 0
        %vm947 = vcmask 1043456
        %v949 = vsel %vm947, %v933, 0
        %v952 = vsel %vm947, %v934, 0
        %954 = vmatprep.subr.bf16.mxu0 %v926
        %955 = vmatpush1.bf16.msra.mxu0 %v925
        %956 = vmatprep.subr.bf16.mxu0 %v928
        %957 = vmatpush1.bf16.msra.mxu0 %v927
        %958 = vmatprep.subr.bf16.mxu0 %v930
        %959 = vmatpush1.bf16.msra.mxu0 %v929
        %960 = vmatprep.subr.bf16.mxu0 %v932
        %961 = vmatpush1.bf16.msra.mxu0 %v931
        %962 = vmatprep.subr.bf16.mxu0 %v952
        %963 = vmatpush1.bf16.msra.mxu0 %v949
        %964 = vmatprep.subr.bf16.mxu0 0
        %965 = vmatpush1.bf16.msra.mxu0 0
        %966 = vmatprep.subr.bf16.mxu0 0
        %967 = vmatpush1.bf16.msra.mxu0 0
        %968 = vmatprep.subr.bf16.mxu0 0
        %969 = vmatpush1.bf16.msra.mxu0 0
        %970 = vmatprep.subr.bf16.mxu0 0
        %971 = vmatpush1.bf16.msra.mxu0 0
        %972 = vmatprep.subr.bf16.mxu0 0
        %973 = vmatpush1.bf16.msra.mxu0 0
        %974 = vmatprep.subr.bf16.mxu0 0
        %975 = vmatpush1.bf16.msra.mxu0 0
        %976 = vmatprep.subr.bf16.mxu0 0
        %977 = vmatpush1.bf16.msra.mxu0 0
        %978 = vmatprep.subr.bf16.mxu0 0
        %979 = vmatpush1.bf16.msra.mxu0 0
        %980 = vmatprep.subr.bf16.mxu0 0
        %981 = vmatpush1.bf16.msra.mxu0 0
        %982 = vmatprep.subr.bf16.mxu0 0
        %983 = vmatpush1.bf16.msra.mxu0 0
        %984 = vmatprep.subr.bf16.mxu0 0
        %985 = vmatpush1.bf16.msra.mxu0 0
        %986 = vmatprep.mubr.bf16.mxu0 0
        %987 = vmatmul.mubr.bf16.gmra.mrb[0].mxu0 %v945
        %v988 = vpop.f32.mrb[0].mxu0
        %v989 = vadd.f32 0.0, %v988
        %v990 = vpop.f32.mrb[0].mxu0
        %v991 = vadd.f32 0.0, %v990
        %v992 = vpop.f32.mrb[0].mxu0
        %v993 = vadd.f32 0.0, %v992
        %v994 = vpop.f32.mrb[0].mxu0
        %v995 = vadd.f32 0.0, %v994
        %996 = vdwg.mxu0
        %v997 = vadd.f32 %v993, 1e-08
        %v998 = vadd.f32 %v995, 1e-08
        %v999 = vrcp.pop %v997
        %v1000 = vrcp.pop %v998
        %v1001 = vmul.f32 %v997, %v999
        %v1002 = vmul.f32 %v998, %v1000
        %v1003 = vsub.f32 2.0, %v1001
        %v1004 = vsub.f32 2.0, %v1002
        %v1005 = vmul.f32 %v999, %v1003
        %v1006 = vmul.f32 %v1000, %v1004
        %v1007 = vlaneseq
        %v1008 = vshrl.u32 %v1007, 7
        %v1009 = vsub.s32 0, %v1008
        %v1010 = vrot.slane %v1005, %v1009
        %v1011 = vlaneseq
        %v1012 = vshrl.u32 %v1011, 7
        %v1013 = vsub.s32 0, %v1012
        %v1014 = vrot.slane %v1006, %v1013
        %v1015 = vmul.f32 %v989, %v1010
        %v1016 = vmul.f32 %v991, %v1014
        %v1017 = vld [vmem:[%s4] sm:$0xff]
        %1019 = vset.pattern.permute.xlu0 0
        %1020 = vperm.xlu0 %1019, %v1017
        %v1021 = vpop.permute.xlu0 %1020
        %v1023 = vadd.f32 %v1015, %v1021
        %v1024 = vadd.f32 %v1016, %v1021
        %v1025 = vmax.f32 %v1023, 0.0
        %v1026 = vmax.f32 %v1024, 0.0
        %1027 = vst [vmem:[%s309] sm:$0xff] %v1025
        %1028 = vst [vmem:[%s309 + $0x8] sm:$0xff] %v1026
        %vm1029 = vcmp.lt.s32.totalorder %v321, 256
        %vm1030 = vmand %vm322, %vm1029
        %1031 = vst.msk [vmem:[%s316] sm:$0x3] %vm1030, %v881
        %s1032 = sand.u32 %s153, 1
        %s1033 = scalar_lea.sflag [#allocation7], %s1032
        %s1034 = sand.u32 %s153, 1
        %s1035 = smul.addr %s1034, 16
        %s1036 = scalar_lea.vmem [#allocation10], %s1035
        %s1037 = sand.u32 %s179, 1
        %s1038 = scalar_lea.sflag [#allocation12], %s1037
        %s1039 = sand.u32 %s179, 1
        %s1040 = smul.addr %s1039, 2
        %s1041 = scalar_lea.vmem [#allocation11], %s1040
        // Predicated region
        $region49: #{tpu_custom_call.1} parent=39 // pred_check
          %p1042 = pneg %p163
        $region50: #{tpu_custom_call.1} parent=39 // pred_check_branch
          %1044 = sbr.rel (%p1042) target = $region52
        $region51: #{tpu_custom_call.1} parent=39 // pred_region
          %s1046 = ssub.s32 256, 256
          %1047 = vsyncadd %s1033, %s1046
          %s1048 = smul.addr %s30, 2
          %s1049 = smul.addr %s1048, 128
          %s1050 = scalar_lea.hbm %s5, %s1049
          %s1052 = sshll.u32 %s1036, 4
          %s1053 = int_to_ptr.vmem [resolvable:$true] %s1052
          %1055 = dma.vmem_to_hbm [thread:$0]  %s1053, 256, %s1050, %s1033
        $region52: #{tpu_custom_call.1} parent=39 // pred_fallthru
          _
        // Predicated region
        $region53: #{tpu_custom_call.1} parent=39 // pred_check
          %p1056 = pneg %p189
        $region54: #{tpu_custom_call.1} parent=39 // pred_check_branch
          %1058 = sbr.rel (%p1056) target = $region56
        $region55: #{tpu_custom_call.1} parent=39 // pred_region
          %s1060 = ssub.s32 32, 32
          %1061 = vsyncadd %s1038, %s1060
          %s1062 = smul.addr %s30, 2
          %s1063 = smul.addr %s1062, 16
          %s1064 = scalar_lea.hbm %s6, %s1063
          %s1066 = sshll.u32 %s1041, 4
          %s1067 = int_to_ptr.vmem [resolvable:$true] %s1066
          %1069 = dma.vmem_to_hbm [thread:$0]  %s1067, 32, %s1064, %s1038
        $region56: #{tpu_custom_call.1} parent=39 // pred_fallthru
          _
      $region40: #{tpu_custom_call.1} parent=5 // pred_fallthru
        _
      %p1070 = scmp.le.s32.totalorder 2, %s25
      // Predicated region
      $region57: #{tpu_custom_call.1} parent=5 // pred_check
        %p1071 = pneg %p1070
      $region58: #{tpu_custom_call.1} parent=5 // pred_check_branch
        %1073 = sbr.rel (%p1071) target = $region60
      $region59: #{tpu_custom_call.1} parent=5 // pred_region
        %s1074 = ssub.s32 %s25, 2
        // Predicated region
        $region61: #{tpu_custom_call.1} parent=59 // pred_check
          %p1075 = pneg %p169
        $region62: #{tpu_custom_call.1} parent=59 // pred_check_branch
          %1077 = sbr.rel (%p1075) target = $region64
        $region63: #{tpu_custom_call.1} parent=59 // pred_region
          %s1078 = sand.u32 %s154, 1
          %s1079 = scalar_lea.sflag [#allocation7], %s1078
          %s1080 = sand.u32 %s154, 1
          %s1081 = smul.addr %s1080, 16
          %s1082 = scalar_lea.vmem [#allocation10], %s1081
          %1083 = dma.done %s1079, 256
        $region64: #{tpu_custom_call.1} parent=59 // pred_fallthru
          _
        // Predicated region
        $region65: #{tpu_custom_call.1} parent=59 // pred_check
          %p1084 = pneg %p195
        $region66: #{tpu_custom_call.1} parent=59 // pred_check_branch
          %1086 = sbr.rel (%p1084) target = $region68
        $region67: #{tpu_custom_call.1} parent=59 // pred_region
          %s1087 = sand.u32 %s180, 1
          %s1088 = scalar_lea.sflag [#allocation12], %s1087
          %s1089 = sand.u32 %s180, 1
          %s1090 = smul.addr %s1089, 2
          %s1091 = scalar_lea.vmem [#allocation11], %s1090
          %1092 = dma.done %s1088, 32
        $region68: #{tpu_custom_call.1} parent=59 // pred_fallthru
          _
      $region60: #{tpu_custom_call.1} parent=5 // pred_fallthru
        _
    $region6: #{tpu_custom_call.1} parent=1 // loop_footer
      %s29 = sadd.s32 1, %s25
    $region7: #{tpu_custom_call.1} parent=1 // loop_footer_branch
      %24 = sbr.rel target = $region3
    $region8: #{tpu_custom_call.1} parent=1 // loop_exit
      _
    %1093 = vsyncpa [#allocation6], 1
    %s1094 = scalar_lea.sflag [#allocation6], 1
    %1095 = vsyncpa %s1094, 1
    %1096 = vsyncpa [#allocation9], 1
    %s1097 = scalar_lea.sflag [#allocation9], 1
    %1098 = vsyncpa %s1097, 1
    %1099 = vsyncpa [#allocation7], 1
    %s1100 = scalar_lea.sflag [#allocation7], 1
    %1101 = vsyncpa %s1100, 1
    %1102 = vsyncpa [#allocation12], 1
    %s1103 = scalar_lea.sflag [#allocation12], 1
    %1104 = vsyncpa %s1103, 1

</llo_original>
